<compile_context>
chip_gen: v7x
topology: tpu7x:2x2x1
jax: 0.10.0
libtpu: 0.0.40
codegen_flags: <defaults>
</compile_context>

<pallas_src>
import functools

import jax
import jax.numpy as jnp
from jax.experimental import pallas as pl
from jax.experimental.pallas import tpu as pltpu

EPS = 1e-15  # matches torch_geometric Node2Vec EPS


def _node2vec_loss_kernel(hs_ref, hr_ref, out_ref, *, num_pos, num_neg, walk_tile):
    """One walk tile.

    hs_ref:  [D, TW]     start-node embeddings (walk on lanes)
    hr_ref:  [C, D, TW]  context-node embeddings
    out_ref: [2, TW]     row 0: per-walk sum_c log(sigmoid + EPS)      (pos walks)
                         row 1: per-walk sum_c log(1 - sigmoid + EPS)  (neg walks)
    """
    num_valid = num_pos + num_neg

    # Global walk index of each lane -> pos/neg/pad masks, computed on the VPU
    # from an iota instead of being streamed from HBM.
    lane = jax.lax.broadcasted_iota(jnp.int32, (1, walk_tile), 1)
    widx = pl.program_id(0) * walk_tile + lane                     # [1, TW]
    pos_mask = widx < num_pos                                      # [1, TW] bool
    neg_mask = jnp.logical_and(widx >= num_pos, widx < num_valid)  # [1, TW] bool

    hs = hs_ref[...]                                               # [D, TW]
    hr = hr_ref[...]                                               # [C, D, TW]

    # Batched dot product over D (sublane axis) -> lane-dense [C, TW].
    logits = jnp.sum(hr * hs[None, :, :], axis=1)                  # [C, TW]

    # sigmoid: exp on the EUP slot + cheap VPU ops.
    sig = 1.0 / (1.0 + jnp.exp(-logits))                           # [C, TW]

    # Positive walks use log(sig + EPS); negative walks use log((1 - sig) + EPS),
    # same operand ordering as the reference. Padded walks (both masks false)
    # take the pos branch on real-but-unused embeddings -> finite, zeroed below.
    inner = jnp.where(neg_mask, (1.0 - sig) + EPS, sig + EPS)
    lg = jnp.log(inner)                                            # [C, TW]

    lg_w = jnp.sum(lg, axis=0, keepdims=True)                      # [1, TW]
    out_ref[0:1, :] = jnp.where(pos_mask, lg_w, 0.0)
    out_ref[1:2, :] = jnp.where(neg_mask, lg_w, 0.0)


def node2vec_loss(embedding, pos_rw, neg_rw, *, walk_tile=512):
    """embedding: [N, D] f32; pos_rw/neg_rw: [W, context_size] int32 node ids."""
    N, D = embedding.shape
    Wp = pos_rw.shape[0]
    Wn = neg_rw.shape[0]
    C = pos_rw.shape[1] - 1
    assert neg_rw.shape[1] - 1 == C

    W = Wp + Wn
    # Adaptive lane tile: multiple of 128, no larger than needed for tiny batches.
    tw = max(128, min(walk_tile, pl.cdiv(W, 128) * 128))
    W_pad = pl.cdiv(W, tw) * tw
    num_tiles = W_pad // tw

    # ---- glue: id concat/pad (tiny) + embedding gathers (stay in XLA; see TODO) ----
    rw = jnp.concatenate([pos_rw, neg_rw], axis=0)                 # [W, C+1] int32
    if W_pad != W:
        rw = jnp.pad(rw, ((0, W_pad - W), (0, 0)))                 # pad ids, not embeddings

    hs = jnp.take(embedding, rw[:, 0], axis=0)                     # [W_pad, D]
    hr = jnp.take(embedding, rw[:, 1:].reshape(-1), axis=0)
    hr = hr.reshape(W_pad, C, D)                                   # [W_pad, C, D]

    # Walk-on-lanes layout.
    hs_t = hs.T                                                    # [D, W_pad]
    hr_t = jnp.transpose(hr, (1, 2, 0))                            # [C, D, W_pad]

    cost = pl.CostEstimate(
        flops=2 * W_pad * C * D + 8 * W_pad * C,
        transcendentals=2 * W_pad * C,                             # exp + log per element
        bytes_accessed=4 * (W_pad * D + W_pad * C * D + 2 * W_pad),
    )

    kernel = functools.partial(
        _node2vec_loss_kernel, num_pos=Wp, num_neg=Wn, walk_tile=tw)

    per_walk = pl.pallas_call(
        kernel,
        out_shape=jax.ShapeDtypeStruct((2, W_pad), jnp.float32),
        grid=(num_tiles,),
        in_specs=[
            pl.BlockSpec((D, tw), lambda i: (0, i)),
            pl.BlockSpec((C, D, tw), lambda i: (0, 0, i)),
        ],
        out_specs=pl.BlockSpec((2, tw), lambda i: (0, i)),
        compiler_params=pltpu.CompilerParams(
            dimension_semantics=("parallel",)),                    # lets v7x use both TCs
        cost_estimate=cost,
    )(hs_t, hr_t)

    # Final (tiny) reduction, mean scaling and pos+neg add in the wrapper.
    pos_loss = -jnp.sum(per_walk[0]) / (Wp * C)
    neg_loss = -jnp.sum(per_walk[1]) / (Wn * C)
    return pos_loss + neg_loss


def node2vec_loss_ref(embedding, pos_rw, neg_rw):
    """Pure-JAX reference (mirrors torch_geometric Node2Vec.loss)."""
    D = embedding.shape[1]

    def logits(rw):
        h_start = embedding[rw[:, 0]][:, None, :]                  # [W, 1, D]
        h_rest = embedding[rw[:, 1:].reshape(-1)].reshape(rw.shape[0], -1, D)
        return jnp.sum(h_start * h_rest, axis=-1).reshape(-1)

    out_pos = logits(pos_rw)
    out_neg = logits(neg_rw)
    sig_pos = 1.0 / (1.0 + jnp.exp(-out_pos))
    sig_neg = 1.0 / (1.0 + jnp.exp(-out_neg))
    pos_loss = -jnp.mean(jnp.log(sig_pos + EPS))
    neg_loss = -jnp.mean(jnp.log(1.0 - sig_neg + EPS))
    return pos_loss + neg_loss


if __name__ == "__main__":
    # Node2Vec(..., embedding_dim=32, walk_length=20, context_size=10,
    #          walks_per_node=10, num_negative_samples=1)
    num_nodes = 64
    embedding_dim = 32
    context_size = 10
    num_pos_walks = 100   # small batch of positive context windows
    num_neg_walks = 100   # num_negative_samples=1 -> same count of negative windows

    key = jax.random.PRNGKey(0)
    k_emb, k_pos, k_neg = jax.random.split(key, 3)

    # Scaled-normal init keeps the logits well-conditioned so the f32 comparison
    # against the reference at 1e-5 is meaningful (avoids the 1-sigmoid cliff).
    embedding = 0.5 * jax.random.normal(k_emb, (num_nodes, embedding_dim), dtype=jnp.float32)
    pos_rw = jax.random.randint(k_pos, (num_pos_walks, context_size), 0, num_nodes, dtype=jnp.int32)
    neg_rw = jax.random.randint(k_neg, (num_neg_walks, context_size), 0, num_nodes, dtype=jnp.int32)

    loss = jax.block_until_ready(node2vec_loss(embedding, pos_rw, neg_rw))
    loss_ref = jax.block_until_ready(node2vec_loss_ref(embedding, pos_rw, neg_rw))

    assert jnp.allclose(loss, loss_ref, rtol=1e-5, atol=1e-5), (loss, loss_ref)
    print("KERNEL_OK")
</pallas_src>

<mosaic_0001>
module attributes {stable_mosaic.version = 11 : i64} {
  func.func @_node2vec_loss_kernel(%arg0: i32, %arg1: memref<32x256xf32, #tpu.memory_space<vmem>>, %arg2: memref<9x32x256xf32, #tpu.memory_space<vmem>>, %arg3: memref<2x256xf32, #tpu.memory_space<vmem>>) attributes {dimension_semantics = [#tpu.dimension_semantics<parallel>], iteration_bounds = array<i64: 1>, scalar_prefetch = 0 : i64, scratch_operands = 0 : i64, tpu.core_type = #tpu.core_type<tc>, window_params = [{transform_indices = @transform_0, window_bounds = array<i64: 32, 256>}, {transform_indices = @transform_1, window_bounds = array<i64: 9, 32, 256>}, {transform_indices = @transform_2, window_bounds = array<i64: 2, 256>}]} {
    %0 = tpu.iota {dimensions = array<i32: 1>} : vector<1x256xi32>
    %c256_i32 = arith.constant 256 : i32
    %1 = arith.muli %arg0, %c256_i32 : i32
    %2 = vector.broadcast %1 : i32 to vector<1x256xi32>
    %3 = arith.addi %2, %0 : vector<1x256xi32>
    %c100_i32 = arith.constant 100 : i32
    %4 = vector.broadcast %c100_i32 : i32 to vector<1x256xi32>
    %5 = arith.cmpi slt, %3, %4 : vector<1x256xi32>
    %c100_i32_0 = arith.constant 100 : i32
    %6 = vector.broadcast %c100_i32_0 : i32 to vector<1x256xi32>
    %7 = arith.cmpi sge, %3, %6 : vector<1x256xi32>
    %c200_i32 = arith.constant 200 : i32
    %8 = vector.broadcast %c200_i32 : i32 to vector<1x256xi32>
    %9 = arith.cmpi slt, %3, %8 : vector<1x256xi32>
    %10 = arith.andi %7, %9 : vector<1x256xi1>
    %c0 = arith.constant 0 : index
    %c0_1 = arith.constant 0 : index
    %11 = vector.load %arg1[%c0, %c0_1] : memref<32x256xf32, #tpu.memory_space<vmem>>, vector<32x256xf32>
    %c0_2 = arith.constant 0 : index
    %c0_3 = arith.constant 0 : index
    %c0_4 = arith.constant 0 : index
    %12 = vector.load %arg2[%c0_2, %c0_3, %c0_4] : memref<9x32x256xf32, #tpu.memory_space<vmem>>, vector<9x32x256xf32>
    %13 = vector.shape_cast %11 : vector<32x256xf32> to vector<1x32x256xf32>
    %14 = vector.broadcast %13 : vector<1x32x256xf32> to vector<9x32x256xf32>
    %15 = arith.mulf %12, %14 : vector<9x32x256xf32>
    %cst = arith.constant dense<0.000000e+00> : vector<9x256xf32>
    %16 = vector.multi_reduction <add>, %15, %cst [1] : vector<9x32x256xf32> to vector<9x256xf32>
    %cst_5 = arith.constant 0.000000e+00 : f32
    %17 = vector.broadcast %cst_5 : f32 to vector<9x256xf32>
    %18 = arith.subf %17, %16 : vector<9x256xf32>
    %19 = math.exp %18 : vector<9x256xf32>
    %cst_6 = arith.constant 1.000000e+00 : f32
    %20 = vector.broadcast %cst_6 : f32 to vector<9x256xf32>
    %21 = arith.addf %20, %19 : vector<9x256xf32>
    %cst_7 = arith.constant 1.000000e+00 : f32
    %22 = vector.broadcast %cst_7 : f32 to vector<9x256xf32>
    %23 = arith.divf %22, %21 : vector<9x256xf32>
    %cst_8 = arith.constant 1.000000e+00 : f32
    %24 = vector.broadcast %cst_8 : f32 to vector<9x256xf32>
    %25 = arith.subf %24, %23 : vector<9x256xf32>
    %cst_9 = arith.constant 1.000000e-15 : f32
    %26 = vector.broadcast %cst_9 : f32 to vector<9x256xf32>
    %27 = arith.addf %25, %26 : vector<9x256xf32>
    %cst_10 = arith.constant 1.000000e-15 : f32
    %28 = vector.broadcast %cst_10 : f32 to vector<9x256xf32>
    %29 = arith.addf %23, %28 : vector<9x256xf32>
    %30 = vector.shape_cast %10 : vector<1x256xi1> to vector<1x256xi1>
    %31 = vector.broadcast %30 : vector<1x256xi1> to vector<9x256xi1>
    %32 = arith.select %31, %27, %29 : vector<9x256xi1>, vector<9x256xf32>
    %33 = math.log %32 : vector<9x256xf32>
    %cst_11 = arith.constant dense<0.000000e+00> : vector<256xf32>
    %34 = vector.multi_reduction <add>, %33, %cst_11 [0] : vector<9x256xf32> to vector<256xf32>
    %35 = vector.shape_cast %34 : vector<256xf32> to vector<1x256xf32>
    %cst_12 = arith.constant 0.000000e+00 : f32
    %36 = vector.broadcast %cst_12 : f32 to vector<1x256xf32>
    %37 = arith.select %5, %35, %36 : vector<1x256xi1>, vector<1x256xf32>
    %c0_13 = arith.constant 0 : index
    %c0_14 = arith.constant 0 : index
    %38 = vector.load %arg3[%c0_13, %c0_14] : memref<2x256xf32, #tpu.memory_space<vmem>>, vector<1x256xf32>
    tpu.vector_store %arg3[%c0_13, %c0_14], %37 {strides = array<i32>} : memref<2x256xf32, #tpu.memory_space<vmem>>, vector<1x256xf32>,
    %cst_15 = arith.constant 0.000000e+00 : f32
    %39 = vector.broadcast %cst_15 : f32 to vector<1x256xf32>
    %40 = arith.select %10, %35, %39 : vector<1x256xi1>, vector<1x256xf32>
    %c1 = arith.constant 1 : index
    %c0_16 = arith.constant 0 : index
    %41 = vector.load %arg3[%c1, %c0_16] : memref<2x256xf32, #tpu.memory_space<vmem>>, vector<1x256xf32>
    tpu.vector_store %arg3[%c1, %c0_16], %40 {strides = array<i32>} : memref<2x256xf32, #tpu.memory_space<vmem>>, vector<1x256xf32>,
    return
  }
  func.func @transform_0(%arg0: i32) -> (i32, i32) {
    %c0_i32 = arith.constant 0 : i32
    %c0_i32_0 = arith.constant 0 : i32
    return %c0_i32, %arg0 : i32, i32
  }
  func.func @transform_1(%arg0: i32) -> (i32, i32, i32) {
    %c0_i32 = arith.constant 0 : i32
    %c0_i32_0 = arith.constant 0 : i32
    %c0_i32_1 = arith.constant 0 : i32
    return %c0_i32, %c0_i32_0, %arg0 : i32, i32, i32
  }
  func.func @transform_2(%arg0: i32) -> (i32, i32) {
    %c0_i32 = arith.constant 0 : i32
    %c0_i32_0 = arith.constant 0 : i32
    return %c0_i32, %arg0 : i32, i32
  }
}

</mosaic_0001>

<llo_original>
// kernel: tpu_custom_call.1
$region0: #{tpu_custom_call.1}
  #allocation0 [shape = 'u32[]', space=smem, size = 0x4, offset = 0x4, fixed_abs, tag = 'smem constant byte address 0x4 - core index']
  #allocation1 [shape = 'u32[144,128]{1,0:T(1,128)}', space=vmem, size = 0x12000, scoped, tag = 'internal scratch']
  %s0 = inlined_call_operand.hbm [shape: f32[32,256], index: 0, kind: input, shape index: {}]
  %s1 = inlined_call_operand.hbm [shape: f32[9,32,256], index: 1, kind: input, shape index: {}]
  %s2 = inlined_call_operand.hbm [shape: f32[2,256], index: 2, kind: output, shape index: {}]
  %s3 = sld [smem:[#allocation0]]
  $region26: #{tpu_custom_call.1} parent=0
    _
  %s5 = ssub.s32 1, %s3
  %s6 = scalar_select 0, %s5, %s3
  $region1: #{tpu_custom_call.1} parent=0
    #allocation2 [shape = 'u8[32768]{0}', space=vmem, size = 0x8000, scoped, tag = 'input window, operand 0, single buffered']
    #allocation3 [shape = 's32[1]{0}', space=sflag, size = 0x4, scoped, tag = 'scoped memory for tpu_custom_call.1']
    #allocation4 [shape = 's32[1]{0}', space=sflag, size = 0x4, scoped, tag = 'scoped memory for tpu_custom_call.1']
    #allocation5 [shape = 'u8[294912]{0}', space=vmem, size = 0x48000, scoped, tag = 'input window, operand 1, single buffered']
    #allocation6 [shape = 's32[1]{0}', space=sflag, size = 0x4, scoped, tag = 'scoped memory for tpu_custom_call.1']
    #allocation7 [shape = 'u8[2048]{0}', space=vmem, size = 0x800, scoped, tag = 'output window, operand 0, single buffered']
    %7 = vsyncpa [#allocation3], 0
    %8 = vsyncpa [#allocation6], 0
    %9 = vsyncpa [#allocation4], 0
    // Predicated region
    $region2: #{tpu_custom_call.1} parent=1 // pred_check
      _
    $region3: #{tpu_custom_call.1} parent=1 // pred_check_branch
      %11 = sbr.rel (0) target = $region5
    $region4: #{tpu_custom_call.1} parent=1 // pred_region
      %s13 = ssub.s32 1024, 1024
      %14 = vsyncadd [#allocation3], %s13
      %s15 = sshll.u32 [#allocation2], 4
      %s16 = int_to_ptr.vmem [resolvable:$true] %s15
      %21 = dma.hbm_to_vmem [thread:$0]  %s0, 1024, %s16, [#allocation3], 256, 256, 16
    $region5: #{tpu_custom_call.1} parent=1 // pred_fallthru
      _
    // Predicated region
    $region6: #{tpu_custom_call.1} parent=1 // pred_check
      _
    $region7: #{tpu_custom_call.1} parent=1 // pred_check_branch
      %23 = sbr.rel (0) target = $region9
    $region8: #{tpu_custom_call.1} parent=1 // pred_region
      %s25 = ssub.s32 9216, 9216
      %26 = vsyncadd [#allocation6], %s25
      %s27 = sshll.u32 [#allocation5], 4
      %s28 = int_to_ptr.vmem [resolvable:$true] %s27
      %33 = dma.hbm_to_vmem [thread:$0]  %s1, 9216, %s28, [#allocation6], 256, 256, 16
    $region9: #{tpu_custom_call.1} parent=1 // pred_fallthru
      _
    // Predicated region
    $region10: #{tpu_custom_call.1} parent=1 // pred_check
      _
    $region11: #{tpu_custom_call.1} parent=1 // pred_check_branch
      %35 = sbr.rel (0) target = $region13
    $region12: #{tpu_custom_call.1} parent=1 // pred_region
      %36 = dma.done [#allocation3], 1024
    $region13: #{tpu_custom_call.1} parent=1 // pred_fallthru
      _
    // Predicated region
    $region14: #{tpu_custom_call.1} parent=1 // pred_check
      _
    $region15: #{tpu_custom_call.1} parent=1 // pred_check_branch
      %38 = sbr.rel (0) target = $region17
    $region16: #{tpu_custom_call.1} parent=1 // pred_region
      %39 = dma.done [#allocation6], 9216
    $region17: #{tpu_custom_call.1} parent=1 // pred_fallthru
      _
    %v40 = vlaneseq
    %v41 = vand.u32 %v40, 127
    %v42 = vadd.s32 %v41, 128
    %s43 = smul.u32 0, 256
    %v44 = vstv %s43
    %v45 = vadd.s32 %v44, %v41
    %v46 = vadd.s32 %v44, %v42
    %vm47 = vcmp.lt.s32.totalorder %v45, 100
    %vm48 = vcmp.lt.s32.totalorder %v46, 100
    %vm49 = vcmp.ge.s32.totalorder %v45, 100
    %vm50 = vcmp.ge.s32.totalorder %v46, 100
    %vm51 = vcmp.lt.s32.totalorder %v45, 200
    %vm52 = vcmp.lt.s32.totalorder %v46, 200
    %vm53 = vmand %vm49, %vm51
    %vm54 = vmand %vm50, %vm52
    %v55 = vld [vmem:[#allocation2] sm:$0xff]
    %v56 = vld [vmem:[#allocation2 + $0x8] sm:$0xff]
    %v57 = vld [vmem:[#allocation2 + $0x10] sm:$0xff]
    %v58 = vld [vmem:[#allocation2 + $0x18] sm:$0xff]
    %v59 = vld [vmem:[#allocation2 + $0x20] sm:$0xff]
    %v60 = vld [vmem:[#allocation2 + $0x28] sm:$0xff]
    %v61 = vld [vmem:[#allocation2 + $0x30] sm:$0xff]
    %v62 = vld [vmem:[#allocation2 + $0x38] sm:$0xff]
    %v63 = vld [vmem:[#allocation5] sm:$0xff]
    %v64 = vld [vmem:[#allocation5 + $0x8] sm:$0xff]
    %v65 = vld [vmem:[#allocation5 + $0x10] sm:$0xff]
    %v66 = vld [vmem:[#allocation5 + $0x18] sm:$0xff]
    %v67 = vld [vmem:[#allocation5 + $0x20] sm:$0xff]
    %v68 = vld [vmem:[#allocation5 + $0x28] sm:$0xff]
    %v69 = vld [vmem:[#allocation5 + $0x30] sm:$0xff]
    %v70 = vld [vmem:[#allocation5 + $0x38] sm:$0xff]
    %v71 = vld [vmem:[#allocation5 + $0x40] sm:$0xff]
    %v72 = vld [vmem:[#allocation5 + $0x48] sm:$0xff]
    %v73 = vld [vmem:[#allocation5 + $0x50] sm:$0xff]
    %v74 = vld [vmem:[#allocation5 + $0x58] sm:$0xff]
    %v75 = vld [vmem:[#allocation5 + $0x60] sm:$0xff]
    %v76 = vld [vmem:[#allocation5 + $0x68] sm:$0xff]
    %v77 = vld [vmem:[#allocation5 + $0x70] sm:$0xff]
    %v78 = vld [vmem:[#allocation5 + $0x78] sm:$0xff]
    %v79 = vld [vmem:[#allocation5 + $0x80] sm:$0xff]
    %v80 = vld [vmem:[#allocation5 + $0x88] sm:$0xff]
    %v81 = vld [vmem:[#allocation5 + $0x90] sm:$0xff]
    %v82 = vld [vmem:[#allocation5 + $0x98] sm:$0xff]
    %v83 = vld [vmem:[#allocation5 + $0xa0] sm:$0xff]
    %v84 = vld [vmem:[#allocation5 + $0xa8] sm:$0xff]
    %v85 = vld [vmem:[#allocation5 + $0xb0] sm:$0xff]
    %v86 = vld [vmem:[#allocation5 + $0xb8] sm:$0xff]
    %v87 = vld [vmem:[#allocation5 + $0xc0] sm:$0xff]
    %v88 = vld [vmem:[#allocation5 + $0xc8] sm:$0xff]
    %v89 = vld [vmem:[#allocation5 + $0xd0] sm:$0xff]
    %v90 = vld [vmem:[#allocation5 + $0xd8] sm:$0xff]
    %v91 = vld [vmem:[#allocation5 + $0xe0] sm:$0xff]
    %v92 = vld [vmem:[#allocation5 + $0xe8] sm:$0xff]
    %v93 = vld [vmem:[#allocation5 + $0xf0] sm:$0xff]
    %v94 = vld [vmem:[#allocation5 + $0xf8] sm:$0xff]
    %v95 = vld [vmem:[#allocation5 + $0x100] sm:$0xff]
    %v96 = vld [vmem:[#allocation5 + $0x108] sm:$0xff]
    %v97 = vld [vmem:[#allocation5 + $0x110] sm:$0xff]
    %v98 = vld [vmem:[#allocation5 + $0x118] sm:$0xff]
    %v99 = vld [vmem:[#allocation5 + $0x120] sm:$0xff]
    %v100 = vld [vmem:[#allocation5 + $0x128] sm:$0xff]
    %v101 = vld [vmem:[#allocation5 + $0x130] sm:$0xff]
    %v102 = vld [vmem:[#allocation5 + $0x138] sm:$0xff]
    %v103 = vld [vmem:[#allocation5 + $0x140] sm:$0xff]
    %v104 = vld [vmem:[#allocation5 + $0x148] sm:$0xff]
    %v105 = vld [vmem:[#allocation5 + $0x150] sm:$0xff]
    %v106 = vld [vmem:[#allocation5 + $0x158] sm:$0xff]
    %v107 = vld [vmem:[#allocation5 + $0x160] sm:$0xff]
    %v108 = vld [vmem:[#allocation5 + $0x168] sm:$0xff]
    %v109 = vld [vmem:[#allocation5 + $0x170] sm:$0xff]
    %v110 = vld [vmem:[#allocation5 + $0x178] sm:$0xff]
    %v111 = vld [vmem:[#allocation5 + $0x180] sm:$0xff]
    %v112 = vld [vmem:[#allocation5 + $0x188] sm:$0xff]
    %v113 = vld [vmem:[#allocation5 + $0x190] sm:$0xff]
    %v114 = vld [vmem:[#allocation5 + $0x198] sm:$0xff]
    %v115 = vld [vmem:[#allocation5 + $0x1a0] sm:$0xff]
    %v116 = vld [vmem:[#allocation5 + $0x1a8] sm:$0xff]
    %v117 = vld [vmem:[#allocation5 + $0x1b0] sm:$0xff]
    %v118 = vld [vmem:[#allocation5 + $0x1b8] sm:$0xff]
    %v119 = vld [vmem:[#allocation5 + $0x1c0] sm:$0xff]
    %v120 = vld [vmem:[#allocation5 + $0x1c8] sm:$0xff]
    %v121 = vld [vmem:[#allocation5 + $0x1d0] sm:$0xff]
    %v122 = vld [vmem:[#allocation5 + $0x1d8] sm:$0xff]
    %v123 = vld [vmem:[#allocation5 + $0x1e0] sm:$0xff]
    %v124 = vld [vmem:[#allocation5 + $0x1e8] sm:$0xff]
    %v125 = vld [vmem:[#allocation5 + $0x1f0] sm:$0xff]
    %v126 = vld [vmem:[#allocation5 + $0x1f8] sm:$0xff]
    %v127 = vld [vmem:[#allocation5 + $0x200] sm:$0xff]
    %v128 = vld [vmem:[#allocation5 + $0x208] sm:$0xff]
    %v129 = vld [vmem:[#allocation5 + $0x210] sm:$0xff]
    %v130 = vld [vmem:[#allocation5 + $0x218] sm:$0xff]
    %v131 = vld [vmem:[#allocation5 + $0x220] sm:$0xff]
    %v132 = vld [vmem:[#allocation5 + $0x228] sm:$0xff]
    %v133 = vld [vmem:[#allocation5 + $0x230] sm:$0xff]
    %v134 = vld [vmem:[#allocation5 + $0x238] sm:$0xff]
    %v135 = vmul.f32 %v63, %v55
    %v136 = vmul.f32 %v64, %v56
    %v137 = vmul.f32 %v65, %v57
    %v138 = vmul.f32 %v66, %v58
    %v139 = vmul.f32 %v67, %v59
    %v140 = vmul.f32 %v68, %v60
    %v141 = vmul.f32 %v69, %v61
    %v142 = vmul.f32 %v70, %v62
    %v143 = vmul.f32 %v71, %v55
    %v144 = vmul.f32 %v72, %v56
    %v145 = vmul.f32 %v73, %v57
    %v146 = vmul.f32 %v74, %v58
    %v147 = vmul.f32 %v75, %v59
    %v148 = vmul.f32 %v76, %v60
    %v149 = vmul.f32 %v77, %v61
    %v150 = vmul.f32 %v78, %v62
    %v151 = vmul.f32 %v79, %v55
    %v152 = vmul.f32 %v80, %v56
    %v153 = vmul.f32 %v81, %v57
    %v154 = vmul.f32 %v82, %v58
    %v155 = vmul.f32 %v83, %v59
    %v156 = vmul.f32 %v84, %v60
    %v157 = vmul.f32 %v85, %v61
    %v158 = vmul.f32 %v86, %v62
    %v159 = vmul.f32 %v87, %v55
    %v160 = vmul.f32 %v88, %v56
    %v161 = vmul.f32 %v89, %v57
    %v162 = vmul.f32 %v90, %v58
    %v163 = vmul.f32 %v91, %v59
    %v164 = vmul.f32 %v92, %v60
    %v165 = vmul.f32 %v93, %v61
    %v166 = vmul.f32 %v94, %v62
    %v167 = vmul.f32 %v95, %v55
    %v168 = vmul.f32 %v96, %v56
    %v169 = vmul.f32 %v97, %v57
    %v170 = vmul.f32 %v98, %v58
    %v171 = vmul.f32 %v99, %v59
    %v172 = vmul.f32 %v100, %v60
    %v173 = vmul.f32 %v101, %v61
    %v174 = vmul.f32 %v102, %v62
    %v175 = vmul.f32 %v103, %v55
    %v176 = vmul.f32 %v104, %v56
    %v177 = vmul.f32 %v105, %v57
    %v178 = vmul.f32 %v106, %v58
    %v179 = vmul.f32 %v107, %v59
    %v180 = vmul.f32 %v108, %v60
    %v181 = vmul.f32 %v109, %v61
    %v182 = vmul.f32 %v110, %v62
    %v183 = vmul.f32 %v111, %v55
    %v184 = vmul.f32 %v112, %v56
    %v185 = vmul.f32 %v113, %v57
    %v186 = vmul.f32 %v114, %v58
    %v187 = vmul.f32 %v115, %v59
    %v188 = vmul.f32 %v116, %v60
    %v189 = vmul.f32 %v117, %v61
    %v190 = vmul.f32 %v118, %v62
    %v191 = vmul.f32 %v119, %v55
    %v192 = vmul.f32 %v120, %v56
    %v193 = vmul.f32 %v121, %v57
    %v194 = vmul.f32 %v122, %v58
    %v195 = vmul.f32 %v123, %v59
    %v196 = vmul.f32 %v124, %v60
    %v197 = vmul.f32 %v125, %v61
    %v198 = vmul.f32 %v126, %v62
    %v199 = vmul.f32 %v127, %v55
    %v200 = vmul.f32 %v128, %v56
    %v201 = vmul.f32 %v129, %v57
    %v202 = vmul.f32 %v130, %v58
    %v203 = vmul.f32 %v131, %v59
    %v204 = vmul.f32 %v132, %v60
    %v205 = vmul.f32 %v133, %v61
    %v206 = vmul.f32 %v134, %v62
    %v207 = vadd.f32 %v135, %v137
    %v208 = vadd.f32 %v207, %v139
    %v209 = vadd.f32 %v208, %v141
    %v210 = vrot.slane %v209, 4
    %v211 = vadd.f32 %v209, %v210
    %v212 = vrot.slane %v211, 2
    %v213 = vadd.f32 %v211, %v212
    %v214 = vrot.slane %v213, 1
    %v215 = vadd.f32 %v213, %v214
    %v216 = vadd.f32 %v136, %v138
    %v217 = vadd.f32 %v216, %v140
    %v218 = vadd.f32 %v217, %v142
    %v219 = vrot.slane %v218, 4
    %v220 = vadd.f32 %v218, %v219
    %v221 = vrot.slane %v220, 2
    %v222 = vadd.f32 %v220, %v221
    %v223 = vrot.slane %v222, 1
    %v224 = vadd.f32 %v222, %v223
    %v225 = vadd.f32 %v143, %v145
    %v226 = vadd.f32 %v225, %v147
    %v227 = vadd.f32 %v226, %v149
    %v228 = vrot.slane %v227, 4
    %v229 = vadd.f32 %v227, %v228
    %v230 = vrot.slane %v229, 2
    %v231 = vadd.f32 %v229, %v230
    %v232 = vrot.slane %v231, 1
    %v233 = vadd.f32 %v231, %v232
    %v234 = vadd.f32 %v144, %v146
    %v235 = vadd.f32 %v234, %v148
    %v236 = vadd.f32 %v235, %v150
    %v237 = vrot.slane %v236, 4
    %v238 = vadd.f32 %v236, %v237
    %v239 = vrot.slane %v238, 2
    %v240 = vadd.f32 %v238, %v239
    %v241 = vrot.slane %v240, 1
    %v242 = vadd.f32 %v240, %v241
    %v243 = vadd.f32 %v151, %v153
    %v244 = vadd.f32 %v243, %v155
    %v245 = vadd.f32 %v244, %v157
    %v246 = vrot.slane %v245, 4
    %v247 = vadd.f32 %v245, %v246
    %v248 = vrot.slane %v247, 2
    %v249 = vadd.f32 %v247, %v248
    %v250 = vrot.slane %v249, 1
    %v251 = vadd.f32 %v249, %v250
    %v252 = vadd.f32 %v152, %v154
    %v253 = vadd.f32 %v252, %v156
    %v254 = vadd.f32 %v253, %v158
    %v255 = vrot.slane %v254, 4
    %v256 = vadd.f32 %v254, %v255
    %v257 = vrot.slane %v256, 2
    %v258 = vadd.f32 %v256, %v257
    %v259 = vrot.slane %v258, 1
    %v260 = vadd.f32 %v258, %v259
    %v261 = vadd.f32 %v159, %v161
    %v262 = vadd.f32 %v261, %v163
    %v263 = vadd.f32 %v262, %v165
    %v264 = vrot.slane %v263, 4
    %v265 = vadd.f32 %v263, %v264
    %v266 = vrot.slane %v265, 2
    %v267 = vadd.f32 %v265, %v266
    %v268 = vrot.slane %v267, 1
    %v269 = vadd.f32 %v267, %v268
    %v270 = vadd.f32 %v160, %v162
    %v271 = vadd.f32 %v270, %v164
    %v272 = vadd.f32 %v271, %v166
    %v273 = vrot.slane %v272, 4
    %v274 = vadd.f32 %v272, %v273
    %v275 = vrot.slane %v274, 2
    %v276 = vadd.f32 %v274, %v275
    %v277 = vrot.slane %v276, 1
    %v278 = vadd.f32 %v276, %v277
    %v279 = vadd.f32 %v167, %v169
    %v280 = vadd.f32 %v279, %v171
    %v281 = vadd.f32 %v280, %v173
    %v282 = vrot.slane %v281, 4
    %v283 = vadd.f32 %v281, %v282
    %v284 = vrot.slane %v283, 2
    %v285 = vadd.f32 %v283, %v284
    %v286 = vrot.slane %v285, 1
    %v287 = vadd.f32 %v285, %v286
    %v288 = vadd.f32 %v168, %v170
    %v289 = vadd.f32 %v288, %v172
    %v290 = vadd.f32 %v289, %v174
    %v291 = vrot.slane %v290, 4
    %v292 = vadd.f32 %v290, %v291
    %v293 = vrot.slane %v292, 2
    %v294 = vadd.f32 %v292, %v293
    %v295 = vrot.slane %v294, 1
    %v296 = vadd.f32 %v294, %v295
    %v297 = vadd.f32 %v175, %v177
    %v298 = vadd.f32 %v297, %v179
    %v299 = vadd.f32 %v298, %v181
    %v300 = vrot.slane %v299, 4
    %v301 = vadd.f32 %v299, %v300
    %v302 = vrot.slane %v301, 2
    %v303 = vadd.f32 %v301, %v302
    %v304 = vrot.slane %v303, 1
    %v305 = vadd.f32 %v303, %v304
    %v306 = vadd.f32 %v176, %v178
    %v307 = vadd.f32 %v306, %v180
    %v308 = vadd.f32 %v307, %v182
    %v309 = vrot.slane %v308, 4
    %v310 = vadd.f32 %v308, %v309
    %v311 = vrot.slane %v310, 2
    %v312 = vadd.f32 %v310, %v311
    %v313 = vrot.slane %v312, 1
    %v314 = vadd.f32 %v312, %v313
    %v315 = vadd.f32 %v183, %v185
    %v316 = vadd.f32 %v315, %v187
    %v317 = vadd.f32 %v316, %v189
    %v318 = vrot.slane %v317, 4
    %v319 = vadd.f32 %v317, %v318
    %v320 = vrot.slane %v319, 2
    %v321 = vadd.f32 %v319, %v320
    %v322 = vrot.slane %v321, 1
    %v323 = vadd.f32 %v321, %v322
    %v324 = vadd.f32 %v184, %v186
    %v325 = vadd.f32 %v324, %v188
    %v326 = vadd.f32 %v325, %v190
    %v327 = vrot.slane %v326, 4
    %v328 = vadd.f32 %v326, %v327
    %v329 = vrot.slane %v328, 2
    %v330 = vadd.f32 %v328, %v329
    %v331 = vrot.slane %v330, 1
    %v332 = vadd.f32 %v330, %v331
    %v333 = vadd.f32 %v191, %v193
    %v334 = vadd.f32 %v333, %v195
    %v335 = vadd.f32 %v334, %v197
    %v336 = vrot.slane %v335, 4
    %v337 = vadd.f32 %v335, %v336
    %v338 = vrot.slane %v337, 2
    %v339 = vadd.f32 %v337, %v338
    %v340 = vrot.slane %v339, 1
    %v341 = vadd.f32 %v339, %v340
    %v342 = vadd.f32 %v192, %v194
    %v343 = vadd.f32 %v342, %v196
    %v344 = vadd.f32 %v343, %v198
    %v345 = vrot.slane %v344, 4
    %v346 = vadd.f32 %v344, %v345
    %v347 = vrot.slane %v346, 2
    %v348 = vadd.f32 %v346, %v347
    %v349 = vrot.slane %v348, 1
    %v350 = vadd.f32 %v348, %v349
    %v351 = vadd.f32 %v199, %v201
    %v352 = vadd.f32 %v351, %v203
    %v353 = vadd.f32 %v352, %v205
    %v354 = vrot.slane %v353, 4
    %v355 = vadd.f32 %v353, %v354
    %v356 = vrot.slane %v355, 2
    %v357 = vadd.f32 %v355, %v356
    %v358 = vrot.slane %v357, 1
    %v359 = vadd.f32 %v357, %v358
    %v360 = vadd.f32 %v200, %v202
    %v361 = vadd.f32 %v360, %v204
    %v362 = vadd.f32 %v361, %v206
    %v363 = vrot.slane %v362, 4
    %v364 = vadd.f32 %v362, %v363
    %v365 = vrot.slane %v364, 2
    %v366 = vadd.f32 %v364, %v365
    %v367 = vrot.slane %v366, 1
    %v368 = vadd.f32 %v366, %v367
    %v369 = vsub.f32 0.0, %v215
    %v370 = vsub.f32 0.0, %v224
    %v371 = vsub.f32 0.0, %v233
    %v372 = vsub.f32 0.0, %v242
    %v373 = vsub.f32 0.0, %v251
    %v374 = vsub.f32 0.0, %v260
    %v375 = vsub.f32 0.0, %v269
    %v376 = vsub.f32 0.0, %v278
    %v377 = vsub.f32 0.0, %v287
    %v378 = vsub.f32 0.0, %v296
    %v379 = vsub.f32 0.0, %v305
    %v380 = vsub.f32 0.0, %v314
    %v381 = vsub.f32 0.0, %v323
    %v382 = vsub.f32 0.0, %v332
    %v383 = vsub.f32 0.0, %v341
    %v384 = vsub.f32 0.0, %v350
    %v385 = vsub.f32 0.0, %v359
    %v386 = vsub.f32 0.0, %v368
    %v387 = vmul.f32 %v369, 1.442695
    %v388 = vpow.pop %v387
    %v389 = vmul.f32 %v370, 1.442695
    %v390 = vpow.pop %v389
    %v391 = vmul.f32 %v371, 1.442695
    %v392 = vpow.pop %v391
    %v393 = vmul.f32 %v372, 1.442695
    %v394 = vpow.pop %v393
    %v395 = vmul.f32 %v373, 1.442695
    %v396 = vpow.pop %v395
    %v397 = vmul.f32 %v374, 1.442695
    %v398 = vpow.pop %v397
    %v399 = vmul.f32 %v375, 1.442695
    %v400 = vpow.pop %v399
    %v401 = vmul.f32 %v376, 1.442695
    %v402 = vpow.pop %v401
    %v403 = vmul.f32 %v377, 1.442695
    %v404 = vpow.pop %v403
    %v405 = vmul.f32 %v378, 1.442695
    %v406 = vpow.pop %v405
    %v407 = vmul.f32 %v379, 1.442695
    %v408 = vpow.pop %v407
    %v409 = vmul.f32 %v380, 1.442695
    %v410 = vpow.pop %v409
    %v411 = vmul.f32 %v381, 1.442695
    %v412 = vpow.pop %v411
    %v413 = vmul.f32 %v382, 1.442695
    %v414 = vpow.pop %v413
    %v415 = vmul.f32 %v383, 1.442695
    %v416 = vpow.pop %v415
    %v417 = vmul.f32 %v384, 1.442695
    %v418 = vpow.pop %v417
    %v419 = vmul.f32 %v385, 1.442695
    %v420 = vpow.pop %v419
    %v421 = vmul.f32 %v386, 1.442695
    %v422 = vpow.pop %v421
    %v423 = vadd.f32 %v388, 1.0
    %v424 = vadd.f32 %v390, 1.0
    %v425 = vadd.f32 %v392, 1.0
    %v426 = vadd.f32 %v394, 1.0
    %v427 = vadd.f32 %v396, 1.0
    %v428 = vadd.f32 %v398, 1.0
    %v429 = vadd.f32 %v400, 1.0
    %v430 = vadd.f32 %v402, 1.0
    %v431 = vadd.f32 %v404, 1.0
    %v432 = vadd.f32 %v406, 1.0
    %v433 = vadd.f32 %v408, 1.0
    %v434 = vadd.f32 %v410, 1.0
    %v435 = vadd.f32 %v412, 1.0
    %v436 = vadd.f32 %v414, 1.0
    %v437 = vadd.f32 %v416, 1.0
    %v438 = vadd.f32 %v418, 1.0
    %v439 = vadd.f32 %v420, 1.0
    %v440 = vadd.f32 %v422, 1.0
    %v441 = vrcp.pop %v423
    %v442 = vmul.f32 1.0, %v441
    %v443 = vrcp.pop %v424
    %v444 = vmul.f32 1.0, %v443
    %v445 = vrcp.pop %v425
    %v446 = vmul.f32 1.0, %v445
    %v447 = vrcp.pop %v426
    %v448 = vmul.f32 1.0, %v447
    %v449 = vrcp.pop %v427
    %v450 = vmul.f32 1.0, %v449
    %v451 = vrcp.pop %v428
    %v452 = vmul.f32 1.0, %v451
    %v453 = vrcp.pop %v429
    %v454 = vmul.f32 1.0, %v453
    %v455 = vrcp.pop %v430
    %v456 = vmul.f32 1.0, %v455
    %v457 = vrcp.pop %v431
    %v458 = vmul.f32 1.0, %v457
    %v459 = vrcp.pop %v432
    %v460 = vmul.f32 1.0, %v459
    %v461 = vrcp.pop %v433
    %v462 = vmul.f32 1.0, %v461
    %v463 = vrcp.pop %v434
    %v464 = vmul.f32 1.0, %v463
    %v465 = vrcp.pop %v435
    %v466 = vmul.f32 1.0, %v465
    %v467 = vrcp.pop %v436
    %v468 = vmul.f32 1.0, %v467
    %v469 = vrcp.pop %v437
    %v470 = vmul.f32 1.0, %v469
    %v471 = vrcp.pop %v438
    %v472 = vmul.f32 1.0, %v471
    %v473 = vrcp.pop %v439
    %v474 = vmul.f32 1.0, %v473
    %v475 = vrcp.pop %v440
    %v476 = vmul.f32 1.0, %v475
    %v477 = vsub.f32 1.0, %v442
    %v478 = vsub.f32 1.0, %v444
    %v479 = vsub.f32 1.0, %v446
    %v480 = vsub.f32 1.0, %v448
    %v481 = vsub.f32 1.0, %v450
    %v482 = vsub.f32 1.0, %v452
    %v483 = vsub.f32 1.0, %v454
    %v484 = vsub.f32 1.0, %v456
    %v485 = vsub.f32 1.0, %v458
    %v486 = vsub.f32 1.0, %v460
    %v487 = vsub.f32 1.0, %v462
    %v488 = vsub.f32 1.0, %v464
    %v489 = vsub.f32 1.0, %v466
    %v490 = vsub.f32 1.0, %v468
    %v491 = vsub.f32 1.0, %v470
    %v492 = vsub.f32 1.0, %v472
    %v493 = vsub.f32 1.0, %v474
    %v494 = vsub.f32 1.0, %v476
    %v495 = vadd.f32 %v477, 1e-15
    %v496 = vadd.f32 %v478, 1e-15
    %v497 = vadd.f32 %v479, 1e-15
    %v498 = vadd.f32 %v480, 1e-15
    %v499 = vadd.f32 %v481, 1e-15
    %v500 = vadd.f32 %v482, 1e-15
    %v501 = vadd.f32 %v483, 1e-15
    %v502 = vadd.f32 %v484, 1e-15
    %v503 = vadd.f32 %v485, 1e-15
    %v504 = vadd.f32 %v486, 1e-15
    %v505 = vadd.f32 %v487, 1e-15
    %v506 = vadd.f32 %v488, 1e-15
    %v507 = vadd.f32 %v489, 1e-15
    %v508 = vadd.f32 %v490, 1e-15
    %v509 = vadd.f32 %v491, 1e-15
    %v510 = vadd.f32 %v492, 1e-15
    %v511 = vadd.f32 %v493, 1e-15
    %v512 = vadd.f32 %v494, 1e-15
    %v513 = vadd.f32 %v442, 1e-15
    %v514 = vadd.f32 %v444, 1e-15
    %v515 = vadd.f32 %v446, 1e-15
    %v516 = vadd.f32 %v448, 1e-15
    %v517 = vadd.f32 %v450, 1e-15
    %v518 = vadd.f32 %v452, 1e-15
    %v519 = vadd.f32 %v454, 1e-15
    %v520 = vadd.f32 %v456, 1e-15
    %v521 = vadd.f32 %v458, 1e-15
    %v522 = vadd.f32 %v460, 1e-15
    %v523 = vadd.f32 %v462, 1e-15
    %v524 = vadd.f32 %v464, 1e-15
    %v525 = vadd.f32 %v466, 1e-15
    %v526 = vadd.f32 %v468, 1e-15
    %v527 = vadd.f32 %v470, 1e-15
    %v528 = vadd.f32 %v472, 1e-15
    %v529 = vadd.f32 %v474, 1e-15
    %v530 = vadd.f32 %v476, 1e-15
    %v531 = vsel %vm53, 1, 0
    %v532 = vsel %vm54, 1, 0
    %vm533 = vcmp.eq.s32.totalorder %v531, 1
    %vm534 = vcmp.eq.s32.totalorder %v532, 1
    %vm553 = vcmask 1041409
    %v554 = vsel %vm553, %v497, %v495
    %vm555 = vcmask 1042434
    %v556 = vsel %vm555, %v499, %v554
    %vm557 = vcmask 1043459
    %v558 = vsel %vm557, %v501, %v556
    %vm559 = vcmask 1044484
    %v560 = vsel %vm559, %v503, %v558
    %vm561 = vcmask 1045509
    %v562 = vsel %vm561, %v505, %v560
    %vm563 = vcmask 1046534
    %v564 = vsel %vm563, %v507, %v562
    %vm565 = vcmask 1047559
    %v566 = vsel %vm565, %v509, %v564
    %v567 = vsel %vm553, %v498, %v496
    %v568 = vsel %vm555, %v500, %v567
    %v569 = vsel %vm557, %v502, %v568
    %v570 = vsel %vm559, %v504, %v569
    %v571 = vsel %vm561, %v506, %v570
    %v572 = vsel %vm563, %v508, %v571
    %v573 = vsel %vm565, %v510, %v572
    %v596 = vsel %vm553, %v515, %v513
    %v597 = vsel %vm555, %v517, %v596
    %v598 = vsel %vm557, %v519, %v597
    %v599 = vsel %vm559, %v521, %v598
    %v600 = vsel %vm561, %v523, %v599
    %v601 = vsel %vm563, %v525, %v600
    %v602 = vsel %vm565, %v527, %v601
    %v603 = vsel %vm553, %v516, %v514
    %v604 = vsel %vm555, %v518, %v603
    %v605 = vsel %vm557, %v520, %v604
    %v606 = vsel %vm559, %v522, %v605
    %v607 = vsel %vm561, %v524, %v606
    %v608 = vsel %vm563, %v526, %v607
    %v609 = vsel %vm565, %v528, %v608
    %v614 = vsel %vm533, %v566, %v602
    %v615 = vsel %vm534, %v573, %v609
    %v616 = vsel %vm533, %v511, %v529
    %v617 = vsel %vm534, %v512, %v530
    %v618 = vlog2.pop %v614
    %v619 = vmul.f32 %v618, 0.6931472
    %v620 = vlog2.pop %v615
    %v621 = vmul.f32 %v620, 0.6931472
    %v622 = vlog2.pop %v616
    %v623 = vmul.f32 %v622, 0.6931472
    %v624 = vlog2.pop %v617
    %v625 = vmul.f32 %v624, 0.6931472
    %vm626 = vcmask 1040384
    %v627 = vsel %vm626, %v623, 0.0
    %v628 = vadd.f32 %v619, %v627
    %v629 = vrot.slane %v628, 4
    %v630 = vadd.f32 %v628, %v629
    %v631 = vrot.slane %v630, 2
    %v632 = vadd.f32 %v630, %v631
    %v633 = vrot.slane %v632, 1
    %v634 = vadd.f32 %v632, %v633
    %v635 = vsel %vm626, %v625, 0.0
    %v636 = vadd.f32 %v621, %v635
    %v637 = vrot.slane %v636, 4
    %v638 = vadd.f32 %v636, %v637
    %v639 = vrot.slane %v638, 2
    %v640 = vadd.f32 %v638, %v639
    %v641 = vrot.slane %v640, 1
    %v642 = vadd.f32 %v640, %v641
    %v643 = vsel %vm47, %v634, 0.0
    %v644 = vsel %vm48, %v642, 0.0
    %v647 = vcombine.low %v643, %v644
    %v649 = vunpack.c.l.s4 1966171168
    %v650 = vunpack.c.0.s8 %v649
    %v651 = vlaneseq
    %v652 = vshrl.u32 %v651, 7
    %v653 = vsub.s32 %v650, %v652
    %v654 = vrot.slane %v647, %v653
    %v656 = vunpack.c.l.s4 1966171168
    %v657 = vunpack.c.0.s8 %v656
    %v658 = vlaneseq
    %v659 = vshrl.u32 %v658, 7
    %v660 = vsub.s32 %v657, %v659
    %v661 = vrot.slane %v654, %v660
    %v663 = vlaneseq
    %vm664 = vcmp.ge.s32.totalorder %v663, 0
    %vm665 = vcmp.lt.s32.totalorder %v663, 256
    %vm666 = vmand %vm664, %vm665
    %667 = vst.msk [vmem:[#allocation7] ss:$2 sm:$0x3] %vm666, %v661
    %v668 = vsel %vm53, %v634, 0.0
    %v669 = vsel %vm54, %v642, 0.0
    %v672 = vcombine.low %v668, %v669
    %v674 = vunpack.c.l.s4 1966171168
    %v675 = vunpack.c.0.s8 %v674
    %v676 = vlaneseq
    %v677 = vshrl.u32 %v676, 7
    %v678 = vsub.s32 %v675, %v677
    %v679 = vrot.slane %v672, %v678
    %v681 = vunpack.c.l.s4 1966171168
    %v682 = vunpack.c.0.s8 %v681
    %v683 = vlaneseq
    %v684 = vshrl.u32 %v683, 7
    %v685 = vsub.s32 %v682, %v684
    %v686 = vrot.slane %v679, %v685
    %s688 = scalar_lea.vmem [#allocation7], 1
    %689 = vst.msk [vmem:[%s688] ss:$2 sm:$0x3] %vm666, %v686
    // Predicated region
    $region18: #{tpu_custom_call.1} parent=1 // pred_check
      _
    $region19: #{tpu_custom_call.1} parent=1 // pred_check_branch
      %691 = sbr.rel (0) target = $region21
    $region20: #{tpu_custom_call.1} parent=1 // pred_region
      %s693 = ssub.s32 64, 64
      %694 = vsyncadd [#allocation4], %s693
      %s696 = sshll.u32 [#allocation7], 4
      %s697 = int_to_ptr.vmem [resolvable:$true] %s696
      %699 = dma.vmem_to_hbm [thread:$0]  %s697, 64, %s2, [#allocation4]
    $region21: #{tpu_custom_call.1} parent=1 // pred_fallthru
      _
    // Predicated region
    $region22: #{tpu_custom_call.1} parent=1 // pred_check
      _
    $region23: #{tpu_custom_call.1} parent=1 // pred_check_branch
      %701 = sbr.rel (0) target = $region25
    $region24: #{tpu_custom_call.1} parent=1 // pred_region
      %702 = dma.done [#allocation4], 64
    $region25: #{tpu_custom_call.1} parent=1 // pred_fallthru
      _
    %703 = vsyncpa [#allocation3], 1
    %704 = vsyncpa [#allocation6], 1
    %705 = vsyncpa [#allocation4], 1

</llo_original>
